<compile_context>
chip_gen: v7x
topology: tpu7x:2x2x1
jax: 0.10.0
libtpu: 0.0.40
codegen_flags: <defaults>
</compile_context>

<pallas_src>
import functools

import jax
import jax.numpy as jnp
from jax.experimental import pallas as pl
from jax.experimental.pallas import tpu as pltpu

D = 8  # feature dim (Linear(8, 8))


def _attn_kernel(p_ref, o_ref, *, m):
    """p_ref: (4D, D) packed buffer:
         rows 0:D    -> Wq * scale                      (D, D)
         rows D:2D   -> Wv^T                            (D, D)
         rows 2D:3D  -> col 0 = bq*scale, cols 1:1+m = x^T, rest 0
         rows 3D:4D  -> row 0 = bv,       rows 1:1+m = y,   rest 0
    """
    d = o_ref.shape[0]
    wq_s = p_ref[0:d, :]           # (D, D), scale pre-folded
    wv_t = p_ref[d:2 * d, :]       # (D, D)
    blk2 = p_ref[2 * d:3 * d, :]   # (D, D)
    blk3 = p_ref[3 * d:4 * d, :]   # (D, D)

    bq_col = blk2[:, 0:1]          # (D, 1)
    x_t = blk2[:, 1:1 + m]         # (D, M)
    bv_row = blk3[0:1, :]          # (1, D)
    y = blk3[1:1 + m, :]           # (M, D)

    # q3 = (x @ Wq.T + bq).T / inv_scale  ==  (Wq*scale) @ x.T + (bq*scale)[:, None]
    q_t = jnp.dot(wq_s, x_t, preferred_element_type=jnp.float32) + bq_col   # (D, M)
    # v1 = y @ Wv.T + bv
    v1 = jnp.dot(y, wv_t, preferred_element_type=jnp.float32) + bv_row      # (M, D)

    # q4 = softmax(q3, dim=-1)   (exact divide; negligible cost at this size)
    q_t = q_t - jnp.max(q_t, axis=-1, keepdims=True)
    e = jnp.exp(q_t)
    p = e / jnp.sum(e, axis=-1, keepdims=True)

    # d1 = dropout(q4) -> identity (eval mode);  o1 = d1 @ v1 -> (D, D)
    o_ref[...] = jnp.dot(p, v1, preferred_element_type=jnp.float32).astype(o_ref.dtype)


@functools.partial(jax.jit, static_argnames=("inv_scale_factor",))
def model_forward(x, y, wq, bq, wv, bv, *, inv_scale_factor=1.0):
    M, Dx = x.shape
    d = Dx
    assert y.shape == (M, d)
    assert M + 1 <= d, "packing layout assumes M + 1 <= D"

    f32 = jnp.float32
    scale = 1.0 / float(inv_scale_factor)   # static -> folded at trace time
    wq_s = wq.astype(f32) * scale if scale != 1.0 else wq.astype(f32)
    bq_s = bq.astype(f32) * scale if scale != 1.0 else bq.astype(f32)

    # Pack all operands into one contiguous (4D, D) buffer -> a single DMA.
    blk2 = jnp.concatenate(
        [bq_s[:, None], x.T.astype(f32), jnp.zeros((d, d - 1 - M), f32)], axis=1)
    blk3 = jnp.concatenate(
        [bv.astype(f32)[None, :], y.astype(f32), jnp.zeros((d - 1 - M, d), f32)], axis=0)
    packed = jnp.concatenate([wq_s, wv.astype(f32).T, blk2, blk3], axis=0)  # (4D, D)

    kernel = functools.partial(_attn_kernel, m=M)
    return pl.pallas_call(
        kernel,
        out_shape=jax.ShapeDtypeStruct((d, d), jnp.float32),
        in_specs=[pl.BlockSpec(memory_space=pltpu.MemorySpace.VMEM)],
        out_specs=pl.BlockSpec(memory_space=pltpu.MemorySpace.VMEM),
    )(packed)


def _reference(x, y, wq, bq, wv, bv, inv_scale_factor=1.0):
    q1 = x @ wq.T + bq
    v1 = y @ wv.T + bv
    q3 = q1.T / inv_scale_factor
    q4 = jax.nn.softmax(q3, axis=-1)
    return q4 @ v1


if __name__ == "__main__":
    key = jax.random.PRNGKey(0)
    kx, ky, k1, k2, k3, k4 = jax.random.split(key, 6)

    M = 2  # batch size for both x and y (must match so the final matmul is valid)
    x = jax.random.normal(kx, (M, D), dtype=jnp.float32)
    y = jax.random.normal(ky, (M, D), dtype=jnp.float32)

    # Deterministic parameter init mimicking nn.Linear default: U(-1/sqrt(D), 1/sqrt(D))
    bound = 1.0 / (D ** 0.5)
    wq = jax.random.uniform(k1, (D, D), jnp.float32, -bound, bound)
    bq = jax.random.uniform(k2, (D,), jnp.float32, -bound, bound)
    wv = jax.random.uniform(k3, (D, D), jnp.float32, -bound, bound)
    bv = jax.random.uniform(k4, (D,), jnp.float32, -bound, bound)

    out = model_forward(x, y, wq, bq, wv, bv)
    jax.block_until_ready(out)

    ref = _reference(x, y, wq, bq, wv, bv)
    assert out.shape == (D, D)
    assert jnp.allclose(out, ref, atol=1e-5, rtol=1e-5), "mismatch vs reference"

    print("KERNEL_OK")
</pallas_src>

<mosaic_0001>
module attributes {stable_mosaic.version = 11 : i64} {
  func.func @_attn_kernel(%arg0: memref<32x8xf32, #tpu.memory_space<vmem>>, %arg1: memref<8x8xf32, #tpu.memory_space<vmem>>) attributes {dimension_semantics = [], scalar_prefetch = 0 : i64, scratch_operands = 0 : i64, tpu.core_type = #tpu.core_type<tc>} {
    %c0 = arith.constant 0 : index
    %c0_0 = arith.constant 0 : index
    %0 = vector.load %arg0[%c0, %c0_0] : memref<32x8xf32, #tpu.memory_space<vmem>>, vector<8x8xf32>
    %c8 = arith.constant 8 : index
    %c0_1 = arith.constant 0 : index
    %1 = vector.load %arg0[%c8, %c0_1] : memref<32x8xf32, #tpu.memory_space<vmem>>, vector<8x8xf32>
    %c16 = arith.constant 16 : index
    %c0_2 = arith.constant 0 : index
    %2 = vector.load %arg0[%c16, %c0_2] : memref<32x8xf32, #tpu.memory_space<vmem>>, vector<8x8xf32>
    %c24 = arith.constant 24 : index
    %c0_3 = arith.constant 0 : index
    %3 = vector.load %arg0[%c24, %c0_3] : memref<32x8xf32, #tpu.memory_space<vmem>>, vector<8x8xf32>
    %4 = vector.extract_strided_slice %2 {offsets = [0, 0], sizes = [8, 1], strides = [1, 1]} : vector<8x8xf32> to vector<8x1xf32>
    %5 = vector.extract_strided_slice %2 {offsets = [0, 1], sizes = [8, 2], strides = [1, 1]} : vector<8x8xf32> to vector<8x2xf32>
    %6 = vector.extract_strided_slice %3 {offsets = [0, 0], sizes = [1, 8], strides = [1, 1]} : vector<8x8xf32> to vector<1x8xf32>
    %7 = vector.extract_strided_slice %3 {offsets = [1, 0], sizes = [2, 8], strides = [1, 1]} : vector<8x8xf32> to vector<2x8xf32>
    %cst = arith.constant dense<0.000000e+00> : vector<8x2xf32>
    %8 = tpu.matmul %0, %5, %cst {dimension_numbers = #tpu.dot_dimension_numbers<[1], [0], [0], [1], [0, 0, 1, 1], [], []>} : vector<8x8xf32>, vector<8x2xf32>, vector<8x2xf32> -> vector<8x2xf32>
    %9 = vector.broadcast %4 : vector<8x1xf32> to vector<8x2xf32>
    %10 = arith.addf %8, %9 : vector<8x2xf32>
    %cst_4 = arith.constant dense<0.000000e+00> : vector<2x8xf32>
    %11 = tpu.matmul %7, %1, %cst_4 {dimension_numbers = #tpu.dot_dimension_numbers<[1], [0], [0], [1], [0, 0, 1, 1], [], []>} : vector<2x8xf32>, vector<8x8xf32>, vector<2x8xf32> -> vector<2x8xf32>
    %12 = vector.broadcast %6 : vector<1x8xf32> to vector<2x8xf32>
    %13 = arith.addf %11, %12 : vector<2x8xf32>
    %cst_5 = arith.constant dense<0xFF800000> : vector<8xf32>
    %14 = vector.multi_reduction <maximumf>, %10, %cst_5 [1] : vector<8x2xf32> to vector<8xf32>
    %15 = vector.shape_cast %14 : vector<8xf32> to vector<8x1xf32>
    %16 = vector.broadcast %15 : vector<8x1xf32> to vector<8x2xf32>
    %17 = arith.subf %10, %16 : vector<8x2xf32>
    %18 = math.exp %17 : vector<8x2xf32>
    %cst_6 = arith.constant dense<0.000000e+00> : vector<8xf32>
    %19 = vector.multi_reduction <add>, %18, %cst_6 [1] : vector<8x2xf32> to vector<8xf32>
    %20 = vector.shape_cast %19 : vector<8xf32> to vector<8x1xf32>
    %21 = vector.broadcast %20 : vector<8x1xf32> to vector<8x2xf32>
    %22 = arith.divf %18, %21 : vector<8x2xf32>
    %cst_7 = arith.constant dense<0.000000e+00> : vector<8x8xf32>
    %23 = tpu.matmul %22, %13, %cst_7 {dimension_numbers = #tpu.dot_dimension_numbers<[1], [0], [0], [1], [0, 0, 1, 1], [], []>} : vector<8x2xf32>, vector<2x8xf32>, vector<8x8xf32> -> vector<8x8xf32>
    %c0_8 = arith.constant 0 : index
    %c0_9 = arith.constant 0 : index
    %24 = vector.load %arg1[%c0_8, %c0_9] : memref<8x8xf32, #tpu.memory_space<vmem>>, vector<8x8xf32>
    tpu.vector_store %arg1[%c0_8, %c0_9], %23 {strides = array<i32>} : memref<8x8xf32, #tpu.memory_space<vmem>>, vector<8x8xf32>,
    return
  }
}

</mosaic_0001>

<llo_original>
// kernel: model_forward.1
$region0: #{model_forward.1}
  #allocation0 [shape = 'u32[]', space=smem, size = 0x4, offset = 0x4, fixed_abs, tag = 'smem constant byte address 0x4 - core index']
  #allocation1 [shape = 'u32[144,128]{1,0:T(1,128)}', space=vmem, size = 0x12000, scoped, tag = 'internal scratch']
  %s0 = inlined_call_operand.vmem [shape: f32[32,8], index: 0, kind: input, shape index: {}]
  %s1 = inlined_call_operand.hbm [shape: f32[8,8], index: 1, kind: output, shape index: {}]
  %s2 = sld [smem:[#allocation0]]
  $region14: #{model_forward.1} parent=0
    _
  %s4 = ssub.s32 1, %s2
  %s5 = scalar_select 0, %s4, %s2
  $region1: #{model_forward.1} parent=0
    #allocation2 [shape = 'u8[4096]{0}', space=vmem, size = 0x1000, scoped, tag = 'output window, operand 0, single buffered']
    #allocation3 [shape = 's32[1]{0}', space=sflag, size = 0x4, scoped, tag = 'scoped memory for model_forward.1']
    %6 = vsyncpa [#allocation3], 0
    // Predicated region
    $region2: #{model_forward.1} parent=1 // pred_check
      _
    $region3: #{model_forward.1} parent=1 // pred_check_branch
      %8 = sbr.rel (0) target = $region5
    $region4: #{model_forward.1} parent=1 // pred_region
      _
    $region5: #{model_forward.1} parent=1 // pred_fallthru
      _
    %v9 = vld [vmem:[%s0] sm:$0xff]
    %v10 = vld [vmem:[%s0 + $0x8] sm:$0xff]
    %v11 = vld [vmem:[%s0 + $0x10] sm:$0xff]
    %v12 = vld [vmem:[%s0 + $0x18] sm:$0xff]
    %14 = vset.pattern.permute.xlu0 0
    %15 = vperm.xlu0 %14, %v11
    %v16 = vpop.permute.xlu0 %15
    %18 = vrot.lane.b32.xlu0 %v11, 127
    %v19 = vpop.permute.xlu0 %18
    %vm21 = vcmask 64512
    %v23 = vsel %vm21, %v9, 0
    %25 = vmatprep.subr.mxu0 0.0
    %26 = vmatpush1.msra.mxu0 %v19
    %27 = vmatprep.subr.mxu0 0.0
    %28 = vmatpush1.msra.mxu0 0.0
    %29 = vmatprep.subr.mxu0 0.0
    %30 = vmatpush1.msra.mxu0 0.0
    %31 = vmatprep.subr.mxu0 0.0
    %32 = vmatpush1.msra.mxu0 0.0
    %33 = vmatprep.subr.mxu0 0.0
    %34 = vmatpush1.msra.mxu0 0.0
    %35 = vmatprep.subr.mxu0 0.0
    %36 = vmatpush1.msra.mxu0 0.0
    %37 = vmatprep.subr.mxu0 0.0
    %38 = vmatpush1.msra.mxu0 0.0
    %39 = vmatprep.subr.mxu0 0.0
    %40 = vmatpush1.msra.mxu0 0.0
    %41 = vmatprep.subr.mxu0 0.0
    %42 = vmatpush1.msra.mxu0 0.0
    %43 = vmatprep.subr.mxu0 0.0
    %44 = vmatpush1.msra.mxu0 0.0
    %45 = vmatprep.subr.mxu0 0.0
    %46 = vmatpush1.msra.mxu0 0.0
    %47 = vmatprep.subr.mxu0 0.0
    %48 = vmatpush1.msra.mxu0 0.0
    %49 = vmatprep.subr.mxu0 0.0
    %50 = vmatpush1.msra.mxu0 0.0
    %51 = vmatprep.subr.mxu0 0.0
    %52 = vmatpush1.msra.mxu0 0.0
    %53 = vmatprep.subr.mxu0 0.0
    %54 = vmatpush1.msra.mxu0 0.0
    %55 = vmatprep.subr.mxu0 0.0
    %56 = vmatpush1.msra.mxu0 0.0
    %57 = vmatprep.subr.mxu0 0.0
    %58 = vmatpush1.msra.mxu0 0.0
    %59 = vmatprep.subr.mxu0 0.0
    %60 = vmatpush1.msra.mxu0 0.0
    %61 = vmatprep.subr.mxu0 0.0
    %62 = vmatpush1.msra.mxu0 0.0
    %63 = vmatprep.subr.mxu0 0.0
    %64 = vmatpush1.msra.mxu0 0.0
    %65 = vmatprep.subr.mxu0 0.0
    %66 = vmatpush1.msra.mxu0 0.0
    %67 = vmatprep.subr.mxu0 0.0
    %68 = vmatpush1.msra.mxu0 0.0
    %69 = vmatprep.subr.mxu0 0.0
    %70 = vmatpush1.msra.mxu0 0.0
    %71 = vmatprep.subr.mxu0 0.0
    %72 = vmatpush1.msra.mxu0 0.0
    %73 = vmatprep.subr.mxu0 0.0
    %74 = vmatpush1.msra.mxu0 0.0
    %75 = vmatprep.subr.mxu0 0.0
    %76 = vmatpush1.msra.mxu0 0.0
    %77 = vmatprep.subr.mxu0 0.0
    %78 = vmatpush1.msra.mxu0 0.0
    %79 = vmatprep.subr.mxu0 0.0
    %80 = vmatpush1.msra.mxu0 0.0
    %81 = vmatprep.subr.mxu0 0.0
    %82 = vmatpush1.msra.mxu0 0.0
    %83 = vmatprep.subr.mxu0 0.0
    %84 = vmatpush1.msra.mxu0 0.0
    %85 = vmatprep.subr.mxu0 0.0
    %86 = vmatpush1.msra.mxu0 0.0
    %87 = vmatprep.subr.mxu0 0.0
    %88 = vmatpush1.msra.mxu0 0.0
    %89 = vmatprep.mubr.f32.mxu0 0.0
    %90 = vmatmul.mubr.f32.gmra.mrb[0].mxu0 %v23
    %v91 = vpop.f32.mrb[0].mxu0
    %v92 = vadd.f32 %v16, %v91
    %v93 = vpop.f32.mrb[0].mxu0
    %94 = vdwg.mxu0
    %v95 = vlaneseq
    %v96 = vshrl.u32 %v95, 7
    %v97 = vsub.s32 0, %v96
    %v98 = vrot.slane %v12, %v97
    %v100 = vrot.slane %v12, 1
    %v101 = vsel %vm21, %v100, 0
    %103 = vmatprep.subr.mxu0 0.0
    %104 = vmatpush1.msra.mxu0 %v10
    %105 = vmatprep.subr.mxu0 0.0
    %106 = vmatpush1.msra.mxu0 0.0
    %107 = vmatprep.subr.mxu0 0.0
    %108 = vmatpush1.msra.mxu0 0.0
    %109 = vmatprep.subr.mxu0 0.0
    %110 = vmatpush1.msra.mxu0 0.0
    %111 = vmatprep.subr.mxu0 0.0
    %112 = vmatpush1.msra.mxu0 0.0
    %113 = vmatprep.subr.mxu0 0.0
    %114 = vmatpush1.msra.mxu0 0.0
    %115 = vmatprep.subr.mxu0 0.0
    %116 = vmatpush1.msra.mxu0 0.0
    %117 = vmatprep.subr.mxu0 0.0
    %118 = vmatpush1.msra.mxu0 0.0
    %119 = vmatprep.subr.mxu0 0.0
    %120 = vmatpush1.msra.mxu0 0.0
    %121 = vmatprep.subr.mxu0 0.0
    %122 = vmatpush1.msra.mxu0 0.0
    %123 = vmatprep.subr.mxu0 0.0
    %124 = vmatpush1.msra.mxu0 0.0
    %125 = vmatprep.subr.mxu0 0.0
    %126 = vmatpush1.msra.mxu0 0.0
    %127 = vmatprep.subr.mxu0 0.0
    %128 = vmatpush1.msra.mxu0 0.0
    %129 = vmatprep.subr.mxu0 0.0
    %130 = vmatpush1.msra.mxu0 0.0
    %131 = vmatprep.subr.mxu0 0.0
    %132 = vmatpush1.msra.mxu0 0.0
    %133 = vmatprep.subr.mxu0 0.0
    %134 = vmatpush1.msra.mxu0 0.0
    %135 = vmatprep.subr.mxu0 0.0
    %136 = vmatpush1.msra.mxu0 0.0
    %137 = vmatprep.subr.mxu0 0.0
    %138 = vmatpush1.msra.mxu0 0.0
    %139 = vmatprep.subr.mxu0 0.0
    %140 = vmatpush1.msra.mxu0 0.0
    %141 = vmatprep.subr.mxu0 0.0
    %142 = vmatpush1.msra.mxu0 0.0
    %143 = vmatprep.subr.mxu0 0.0
    %144 = vmatpush1.msra.mxu0 0.0
    %145 = vmatprep.subr.mxu0 0.0
    %146 = vmatpush1.msra.mxu0 0.0
    %147 = vmatprep.subr.mxu0 0.0
    %148 = vmatpush1.msra.mxu0 0.0
    %149 = vmatprep.subr.mxu0 0.0
    %150 = vmatpush1.msra.mxu0 0.0
    %151 = vmatprep.subr.mxu0 0.0
    %152 = vmatpush1.msra.mxu0 0.0
    %153 = vmatprep.subr.mxu0 0.0
    %154 = vmatpush1.msra.mxu0 0.0
    %155 = vmatprep.subr.mxu0 0.0
    %156 = vmatpush1.msra.mxu0 0.0
    %157 = vmatprep.subr.mxu0 0.0
    %158 = vmatpush1.msra.mxu0 0.0
    %159 = vmatprep.subr.mxu0 0.0
    %160 = vmatpush1.msra.mxu0 0.0
    %161 = vmatprep.subr.mxu0 0.0
    %162 = vmatpush1.msra.mxu0 0.0
    %163 = vmatprep.subr.mxu0 0.0
    %164 = vmatpush1.msra.mxu0 0.0
    %165 = vmatprep.subr.mxu0 0.0
    %166 = vmatpush1.msra.mxu0 0.0
    %167 = vmatprep.mubr.f32.mxu0 0.0
    %168 = vmatmul.mubr.f32.gmra.mrb[0].mxu0 %v101
    %v169 = vpop.f32.mrb[0].mxu0
    %v170 = vadd.f32 %v98, %v169
    %v171 = vpop.f32.mrb[0].mxu0
    %172 = vdwg.mxu0
    %vm173 = vcmask 15360
    %v174 = vsel %vm173, %v92, -inf
    %175 = vmax.xlane.f32.xlu0 %v174
    %v176 = vpop.xlane.xlu0 %175
    %v177 = vsub.f32 %v92, %v176
    %v178 = vmul.f32 %v177, 1.442695
    %v179 = vpow.pop %v178
    %v180 = vsel %vm173, %v179, 0.0
    %181 = vadd.xlane.f32.xlu0 %v180
    %v182 = vpop.xlane.xlu0 %181
    %v183 = vrcp.pop %v182
    %v184 = vmul.f32 %v179, %v183
    %v186 = vsel %vm173, %v184, 0
    %vm188 = vcmask 1041408
    %v190 = vsel %vm188, %v170, 0
    %192 = vmatprep.subr.mxu0 0.0
    %193 = vmatpush1.msra.mxu0 %v190
    %194 = vmatprep.subr.mxu0 0.0
    %195 = vmatpush1.msra.mxu0 0.0
    %196 = vmatprep.subr.mxu0 0.0
    %197 = vmatpush1.msra.mxu0 0.0
    %198 = vmatprep.subr.mxu0 0.0
    %199 = vmatpush1.msra.mxu0 0.0
    %200 = vmatprep.subr.mxu0 0.0
    %201 = vmatpush1.msra.mxu0 0.0
    %202 = vmatprep.subr.mxu0 0.0
    %203 = vmatpush1.msra.mxu0 0.0
    %204 = vmatprep.subr.mxu0 0.0
    %205 = vmatpush1.msra.mxu0 0.0
    %206 = vmatprep.subr.mxu0 0.0
    %207 = vmatpush1.msra.mxu0 0.0
    %208 = vmatprep.subr.mxu0 0.0
    %209 = vmatpush1.msra.mxu0 0.0
    %210 = vmatprep.subr.mxu0 0.0
    %211 = vmatpush1.msra.mxu0 0.0
    %212 = vmatprep.subr.mxu0 0.0
    %213 = vmatpush1.msra.mxu0 0.0
    %214 = vmatprep.subr.mxu0 0.0
    %215 = vmatpush1.msra.mxu0 0.0
    %216 = vmatprep.subr.mxu0 0.0
    %217 = vmatpush1.msra.mxu0 0.0
    %218 = vmatprep.subr.mxu0 0.0
    %219 = vmatpush1.msra.mxu0 0.0
    %220 = vmatprep.subr.mxu0 0.0
    %221 = vmatpush1.msra.mxu0 0.0
    %222 = vmatprep.subr.mxu0 0.0
    %223 = vmatpush1.msra.mxu0 0.0
    %224 = vmatprep.subr.mxu0 0.0
    %225 = vmatpush1.msra.mxu0 0.0
    %226 = vmatprep.subr.mxu0 0.0
    %227 = vmatpush1.msra.mxu0 0.0
    %228 = vmatprep.subr.mxu0 0.0
    %229 = vmatpush1.msra.mxu0 0.0
    %230 = vmatprep.subr.mxu0 0.0
    %231 = vmatpush1.msra.mxu0 0.0
    %232 = vmatprep.subr.mxu0 0.0
    %233 = vmatpush1.msra.mxu0 0.0
    %234 = vmatprep.subr.mxu0 0.0
    %235 = vmatpush1.msra.mxu0 0.0
    %236 = vmatprep.subr.mxu0 0.0
    %237 = vmatpush1.msra.mxu0 0.0
    %238 = vmatprep.subr.mxu0 0.0
    %239 = vmatpush1.msra.mxu0 0.0
    %240 = vmatprep.subr.mxu0 0.0
    %241 = vmatpush1.msra.mxu0 0.0
    %242 = vmatprep.subr.mxu0 0.0
    %243 = vmatpush1.msra.mxu0 0.0
    %244 = vmatprep.subr.mxu0 0.0
    %245 = vmatpush1.msra.mxu0 0.0
    %246 = vmatprep.subr.mxu0 0.0
    %247 = vmatpush1.msra.mxu0 0.0
    %248 = vmatprep.subr.mxu0 0.0
    %249 = vmatpush1.msra.mxu0 0.0
    %250 = vmatprep.subr.mxu0 0.0
    %251 = vmatpush1.msra.mxu0 0.0
    %252 = vmatprep.subr.mxu0 0.0
    %253 = vmatpush1.msra.mxu0 0.0
    %254 = vmatprep.subr.mxu0 0.0
    %255 = vmatpush1.msra.mxu0 0.0
    %256 = vmatprep.mubr.f32.mxu0 0.0
    %257 = vmatmul.mubr.f32.gmra.mrb[0].mxu0 %v186
    %v258 = vpop.f32.mrb[0].mxu0
    %v259 = vadd.f32 0.0, %v258
    %v260 = vpop.f32.mrb[0].mxu0
    %261 = vdwg.mxu0
    %262 = vst.msk [vmem:[#allocation2] sm:$0xff] %vm21, %v259
    // Predicated region
    $region6: #{model_forward.1} parent=1 // pred_check
      _
    $region7: #{model_forward.1} parent=1 // pred_check_branch
      %264 = sbr.rel (0) target = $region9
    $region8: #{model_forward.1} parent=1 // pred_region
      %s266 = ssub.s32 128, 128
      %267 = vsyncadd [#allocation3], %s266
      %s269 = sshll.u32 [#allocation2], 4
      %s270 = int_to_ptr.vmem [resolvable:$true] %s269
      %272 = dma.vmem_to_hbm [thread:$0]  %s270, 128, %s1, [#allocation3]
    $region9: #{model_forward.1} parent=1 // pred_fallthru
      _
    // Predicated region
    $region10: #{model_forward.1} parent=1 // pred_check
      _
    $region11: #{model_forward.1} parent=1 // pred_check_branch
      %274 = sbr.rel (0) target = $region13
    $region12: #{model_forward.1} parent=1 // pred_region
      %275 = dma.done [#allocation3], 128
    $region13: #{model_forward.1} parent=1 // pred_fallthru
      _
    %276 = vsyncpa [#allocation3], 1

</llo_original>
